<compile_context>
chip_gen: v6e
topology: v6e:2x2x1
jax: 0.10.0
libtpu: 0.0.40
codegen_flags: <defaults>
</compile_context>

<pallas_src>
import jax
import jax.numpy as jnp
from jax.experimental import pallas as pl
from jax.experimental.pallas import tpu as pltpu

CIN = 16
COUT = 6
SLAB = 8                 # sublane slab: W0 in rows [0:8), W1 in rows [8:16)
THW_MAX = 32 * 1024      # lane-tile cap: x tile 16*32768*4B = 2 MiB (x2 buffers),
                         # out tile 0.75 MiB (x2) -> ~5.5 MiB, safe on v5e/v6e/v7x.


def _fused_conv1x1_kernel(x_ref, w_ref, b_ref, o_ref):
    # x_ref: (CIN, THW) f32   -- channels on sublanes, pixels on lanes
    # w_ref: (2*SLAB, CIN) bf16  stacked [W0 ; 0 ; W1 ; 0]
    # b_ref: (2*SLAB, 1)   f32   stacked [b0 ; 0 ; b1 ; 0]
    # o_ref: (COUT, THW)   f32
    x = x_ref[...].astype(jnp.bfloat16)
    # One stacked MXU dot computes both convs; accumulate in f32.
    y = jnp.dot(w_ref[...], x, preferred_element_type=jnp.float32) + b_ref[...]
    # Split at the 8-sublane boundary (free), narrow to 6 rows only at the store.
    out8 = jnp.tanh(y[:SLAB]) * y[SLAB:]
    o_ref[...] = out8[:COUT]


def _largest_divisor_leq(n, cap):
    cap = max(1, min(n, cap))
    for d in range(cap, 0, -1):
        if n % d == 0:
            return d
    return 1


def pack_params(w0, b0, w1, b1):
    """Stack the two convs' params: weight -> (16,16) bf16, bias -> (16,1) f32."""
    w = jnp.zeros((2 * SLAB, CIN), jnp.float32)
    w = w.at[0:COUT].set(w0).at[SLAB:SLAB + COUT].set(w1)
    b = jnp.zeros((2 * SLAB, 1), jnp.float32)
    b = b.at[0:COUT].set(b0).at[SLAB:SLAB + COUT].set(b1)
    return w.astype(jnp.bfloat16), b


def fused_conv1x1(x_nc_hw, w_stacked, b_stacked):
    """x_nc_hw: (N, CIN, HW) f32 -> (N, COUT, HW) f32."""
    N, C, HW = x_nc_hw.shape
    assert C == CIN

    if HW % 128 == 0:
        # Pick a lane tile that divides HW exactly -> no wrapper pad / slice.
        units = HW // 128
        cap = THW_MAX // 128
        if N == 1 and units >= 2:
            cap = min(cap, units // 2)  # guarantee >=2 grid steps for v7x megacore
        thw = 128 * _largest_divisor_leq(units, cap)
        hw_pad = HW
        x_in = x_nc_hw
    else:
        # Fallback for ragged HW: pad once in the wrapper (extra HBM round trip).
        thw = min(THW_MAX, pl.cdiv(HW, 128) * 128)
        hw_pad = pl.cdiv(HW, thw) * thw
        x_in = jnp.pad(x_nc_hw, ((0, 0), (0, 0), (0, hw_pad - HW)))

    n_tiles = hw_pad // thw

    cost = pl.CostEstimate(
        flops=2 * 2 * N * hw_pad * CIN * COUT,
        transcendentals=N * hw_pad * COUT,
        bytes_accessed=4 * (N * CIN * hw_pad + N * COUT * hw_pad) + 2 * 2 * SLAB * CIN
        + 4 * 2 * SLAB,
    )

    out = pl.pallas_call(
        _fused_conv1x1_kernel,
        out_shape=jax.ShapeDtypeStruct((N, COUT, hw_pad), jnp.float32),
        grid=(N, n_tiles),
        in_specs=[
            pl.BlockSpec((None, CIN, thw), lambda n, t: (n, 0, t)),      # x tile
            pl.BlockSpec((2 * SLAB, CIN), lambda n, t: (0, 0)),          # stacked W (resident)
            pl.BlockSpec((2 * SLAB, 1), lambda n, t: (0, 0)),            # stacked b (resident)
        ],
        out_specs=pl.BlockSpec((None, COUT, thw), lambda n, t: (n, 0, t)),
        compiler_params=pltpu.CompilerParams(
            dimension_semantics=("parallel", "parallel")),
        cost_estimate=cost,
    )(x_in, w_stacked, b_stacked)

    if hw_pad != HW:
        out = out[:, :, :HW]
    return out


def model_forward(x_nchw, params):
    """Reproduces Model.forward: tanh(conv0(x)) * conv1(x) (1x1 convs), NCHW in/out."""
    w0, b0, w1, b1 = params
    w_stacked, b_stacked = pack_params(w0, b0, w1, b1)
    N, C, H, W = x_nchw.shape
    out = fused_conv1x1(x_nchw.reshape(N, C, H * W), w_stacked, b_stacked)
    return out.reshape(N, COUT, H, W)


def init_params(key):
    # Conv2d(16, 6, 1) weight (6,16,1,1) squeezed to (COUT, CIN); bias as (COUT,1).
    k0, k1, k2, k3 = jax.random.split(key, 4)
    bound = 1.0 / (CIN ** 0.5)  # PyTorch default uniform bound (fan_in = 16*1*1)
    w0 = jax.random.uniform(k0, (COUT, CIN), jnp.float32, -bound, bound)
    b0 = jax.random.uniform(k1, (COUT, 1), jnp.float32, -bound, bound)
    w1 = jax.random.uniform(k2, (COUT, CIN), jnp.float32, -bound, bound)
    b1 = jax.random.uniform(k3, (COUT, 1), jnp.float32, -bound, bound)
    return w0, b0, w1, b1


if __name__ == "__main__":
    key = jax.random.PRNGKey(0)
    kx, kp = jax.random.split(key)
    # Small shapes consistent with the module: N=2, C=16 (fixed by Conv2d(16,6,1)), H=W=16.
    N, H, W = 2, 16, 16
    x = jax.random.normal(kx, (N, CIN, H, W), jnp.float32)
    params = init_params(kp)

    out = model_forward(x, params)
    jax.block_until_ready(out)

    # Plain-JAX f32 reference.  The kernel uses bf16 MXU operands (f32 accumulation),
    # so compare with a tolerance appropriate for bf16 matmul precision.
    w0, b0, w1, b1 = params
    x3 = x.reshape(N, CIN, H * W)
    y0 = jnp.einsum("oc,ncp->nop", w0, x3) + b0[None]
    y1 = jnp.einsum("oc,ncp->nop", w1, x3) + b1[None]
    ref = (jnp.tanh(y0) * y1).reshape(N, COUT, H, W)

    assert out.shape == (N, COUT, H, W)
    max_err = float(jnp.max(jnp.abs(out - ref)))
    assert jnp.allclose(out, ref, atol=2e-2, rtol=2e-2), max_err

    print("KERNEL_OK")
</pallas_src>

<mosaic_0001>
module attributes {stable_mosaic.version = 11 : i64} {
  func.func @_fused_conv1x1_kernel(%arg0: i32, %arg1: i32, %arg2: memref<1x16x256xf32, #tpu.memory_space<vmem>>, %arg3: memref<16x16xbf16, #tpu.memory_space<vmem>>, %arg4: memref<16x1xf32, #tpu.memory_space<vmem>>, %arg5: memref<1x6x256xf32, #tpu.memory_space<vmem>>) attributes {dimension_semantics = [#tpu.dimension_semantics<parallel>, #tpu.dimension_semantics<parallel>], iteration_bounds = array<i64: 2, 1>, scalar_prefetch = 0 : i64, scratch_operands = 0 : i64, tpu.core_type = #tpu.core_type<tc>, window_params = [{transform_indices = @transform_0, window_bounds = array<i64: 1, 16, 256>}, {pipeline_mode = #tpu.pipeline_mode<synchronous>, transform_indices = @transform_1, window_bounds = array<i64: 16, 16>}, {pipeline_mode = #tpu.pipeline_mode<synchronous>, transform_indices = @transform_2, window_bounds = array<i64: 16, 1>}, {transform_indices = @transform_3, window_bounds = array<i64: 1, 6, 256>}]} {
    %c0 = arith.constant 0 : index
    %c0_0 = arith.constant 0 : index
    %c0_1 = arith.constant 0 : index
    %0 = vector.load %arg2[%c0, %c0_0, %c0_1] : memref<1x16x256xf32, #tpu.memory_space<vmem>>, vector<1x16x256xf32>
    %1 = vector.shape_cast %0 : vector<1x16x256xf32> to vector<16x256xf32>
    %2 = arith.truncf %1 : vector<16x256xf32> to vector<16x256xbf16>
    %c0_2 = arith.constant 0 : index
    %c0_3 = arith.constant 0 : index
    %3 = vector.load %arg3[%c0_2, %c0_3] : memref<16x16xbf16, #tpu.memory_space<vmem>>, vector<16x16xbf16>
    %cst = arith.constant dense<0.000000e+00> : vector<16x256xf32>
    %4 = tpu.matmul %3, %2, %cst {dimension_numbers = #tpu.dot_dimension_numbers<[1], [0], [0], [1], [0, 0, 1, 1], [], []>} : vector<16x16xbf16>, vector<16x256xbf16>, vector<16x256xf32> -> vector<16x256xf32>
    %c0_4 = arith.constant 0 : index
    %c0_5 = arith.constant 0 : index
    %5 = vector.load %arg4[%c0_4, %c0_5] : memref<16x1xf32, #tpu.memory_space<vmem>>, vector<16x1xf32>
    %6 = vector.broadcast %5 : vector<16x1xf32> to vector<16x256xf32>
    %7 = arith.addf %4, %6 : vector<16x256xf32>
    %8 = vector.extract_strided_slice %7 {offsets = [0, 0], sizes = [8, 256], strides = [1, 1]} : vector<16x256xf32> to vector<8x256xf32>
    %9 = math.tanh %8 : vector<8x256xf32>
    %10 = vector.extract_strided_slice %7 {offsets = [8, 0], sizes = [8, 256], strides = [1, 1]} : vector<16x256xf32> to vector<8x256xf32>
    %11 = arith.mulf %9, %10 : vector<8x256xf32>
    %12 = vector.extract_strided_slice %11 {offsets = [0, 0], sizes = [6, 256], strides = [1, 1]} : vector<8x256xf32> to vector<6x256xf32>
    %c0_6 = arith.constant 0 : index
    %c0_7 = arith.constant 0 : index
    %c0_8 = arith.constant 0 : index
    %13 = vector.load %arg5[%c0_6, %c0_7, %c0_8] : memref<1x6x256xf32, #tpu.memory_space<vmem>>, vector<1x6x256xf32>
    %14 = vector.shape_cast %13 : vector<1x6x256xf32> to vector<6x256xf32>
    %15 = vector.shape_cast %12 : vector<6x256xf32> to vector<1x6x256xf32>
    tpu.vector_store %arg5[%c0_6, %c0_7, %c0_8], %15 {strides = array<i32>} : memref<1x6x256xf32, #tpu.memory_space<vmem>>, vector<1x6x256xf32>,
    return
  }
  func.func @transform_0(%arg0: i32, %arg1: i32) -> (i32, i32, i32) {
    %c0_i32 = arith.constant 0 : i32
    %c0_i32_0 = arith.constant 0 : i32
    return %arg0, %c0_i32, %arg1 : i32, i32, i32
  }
  func.func @transform_1(%arg0: i32, %arg1: i32) -> (i32, i32) {
    %c0_i32 = arith.constant 0 : i32
    %c0_i32_0 = arith.constant 0 : i32
    %c0_i32_1 = arith.constant 0 : i32
    return %c0_i32, %c0_i32_0 : i32, i32
  }
  func.func @transform_2(%arg0: i32, %arg1: i32) -> (i32, i32) {
    %c0_i32 = arith.constant 0 : i32
    %c0_i32_0 = arith.constant 0 : i32
    %c0_i32_1 = arith.constant 0 : i32
    return %c0_i32, %c0_i32_0 : i32, i32
  }
  func.func @transform_3(%arg0: i32, %arg1: i32) -> (i32, i32, i32) {
    %c0_i32 = arith.constant 0 : i32
    %c0_i32_0 = arith.constant 0 : i32
    return %arg0, %c0_i32, %arg1 : i32, i32, i32
  }
}

</mosaic_0001>

<llo_original>
// kernel: tpu_custom_call.1
$region0: #{tpu_custom_call.1}
  #allocation0 [shape = 'u32[]', space=smem, size = 0x4, offset = 0x4, fixed_abs, tag = 'smem constant byte address 0x4 - core index']
  #allocation1 [shape = 'u32[144,128]{1,0:T(1,128)}', space=vmem, size = 0x12000, scoped, tag = 'internal scratch']
  %s0 = inlined_call_operand.hbm [shape: f32[2,16,256], index: 0, kind: input, shape index: {}]
  %s1 = inlined_call_operand.vmem [shape: bf16[16,16], index: 1, kind: input, shape index: {}]
  %s2 = inlined_call_operand.vmem [shape: f32[16,1], index: 2, kind: input, shape index: {}]
  %s3 = inlined_call_operand.vmem [shape: f32[2,6,256], index: 3, kind: output, shape index: {}]
  %s4 = sld [smem:[#allocation0]]
  $region49: #{tpu_custom_call.1} parent=0
    _
  %s6 = ssub.s32 1, %s4
  %s7 = scalar_select 0, %s6, %s4
  $region1: #{tpu_custom_call.1} parent=0
    #allocation2 [shape = 'u8[32768]{0}', space=vmem, size = 0x8000, scoped, tag = 'input window, operand 0']
    #allocation3 [shape = 's32[2]{0}', space=sflag, size = 0x8, scoped, tag = 'scoped memory for tpu_custom_call.1']
    %8 = vsyncpa [#allocation3], 0
    %s9 = scalar_lea.sflag [#allocation3], 1
    %10 = vsyncpa %s9, 0
    loop: start=0, step=1, limit=4
    $region2: #{tpu_custom_call.1} parent=1 // loop_pre_header
      _
    $region3: #{tpu_custom_call.1} parent=1 // loop_header
      %s12 = sphi 0, %s16
      %p13 = scmp.ge.s32.totalorder %s12, 4
      %s19 = sphi 0, %s31
      %s20 = sphi 0, %s27
      %s21 = sphi 0, %s19
      %s22 = sphi 0, %s20
      %s23 = sphi 0, %s21
      %s24 = sphi 0, %s22
      %s36 = sphi 0, %s38
      %s39 = sphi 0, %s36
      %s40 = sphi 0, %s39
      %s56 = sphi 0, %s40
      %s60 = sphi 0, %s60
      %s62 = sphi 0, %s60
      %s63 = sphi 0, %s62
      %s77 = sphi 0, %s63
      %s81 = sphi 0, %s81
      %s83 = sphi 0, %s81
      %s84 = sphi 0, %s83
      %s98 = sphi 0, %s84
      %s106 = sphi 0, %s108
      %s109 = sphi 0, %s106
      %s110 = sphi 0, %s109
      %s126 = sphi 0, %s110
    $region4: #{tpu_custom_call.1} parent=1 // loop_header_branch
      %15 = sbr.rel (%p13) target = $region8
    $region5: #{tpu_custom_call.1} parent=1 // loop_body
      %s17 = ssub.s32 %s12, 1
      %s18 = ssub.s32 %s12, 2
      %s25 = sadd.s32 1, %s20
      %p26 = scmp.ge.s32.totalorder %s25, 1
      %s27 = scalar_select %p26, 0, %s25
      %s28 = sadd.s32 1, %s19
      %s29 = scalar_select %p26, %s28, %s19
      %p30 = scmp.ge.s32.totalorder %s29, 2
      %s31 = scalar_select %p30, 0, %s29
      %s32 = ssub.s32 %s19, %s31
      %s33 = ssub.s32 %s20, %s27
      %s34 = sor.u32 %s32, %s33
      %p35 = scmp.eq.s32.totalorder %s34, 0
      %s37 = sadd.s32 %s36, 1
      %s38 = scalar_select %p35, %s36, %s37
      %p41 = pneg %p35
      %p42 = scmp.eq.s32.totalorder %s12, 1
      %p43 = por %p41, %p42
      %p44 = scmp.ne.s32.totalorder %s36, %s39
      %p45 = scmp.eq.s32.totalorder %s12, 0
      %p46 = por %p44, %p45
      %p47 = scmp.ne.s32.totalorder %s36, %s39
      %p48 = scmp.eq.s32.totalorder %s17, 1
      %p49 = por %p47, %p48
      %p50 = scmp.ne.s32.totalorder %s39, %s40
      %p51 = scmp.eq.s32.totalorder %s17, 0
      %p52 = por %p50, %p51
      %p53 = scmp.ne.s32.totalorder %s39, %s40
      %p54 = scmp.eq.s32.totalorder %s18, 1
      %p55 = por %p53, %p54
      %p57 = scmp.ne.s32.totalorder %s40, %s56
      %p58 = scmp.eq.s32.totalorder %s18, 0
      %p59 = por %p57, %p58
      %s61 = sadd.s32 %s60, 1
      %p64 = scmp.eq.s32.totalorder %s12, 1
      %p65 = scmp.ne.s32.totalorder %s60, %s62
      %p66 = scmp.eq.s32.totalorder %s12, 0
      %p67 = por %p65, %p66
      %p68 = scmp.ne.s32.totalorder %s60, %s62
      %p69 = scmp.eq.s32.totalorder %s17, 1
      %p70 = por %p68, %p69
      %p71 = scmp.ne.s32.totalorder %s62, %s63
      %p72 = scmp.eq.s32.totalorder %s17, 0
      %p73 = por %p71, %p72
      %p74 = scmp.ne.s32.totalorder %s62, %s63
      %p75 = scmp.eq.s32.totalorder %s18, 1
      %p76 = por %p74, %p75
      %p78 = scmp.ne.s32.totalorder %s63, %s77
      %p79 = scmp.eq.s32.totalorder %s18, 0
      %p80 = por %p78, %p79
      %s82 = sadd.s32 %s81, 1
      %p85 = scmp.eq.s32.totalorder %s12, 1
      %p86 = scmp.ne.s32.totalorder %s81, %s83
      %p87 = scmp.eq.s32.totalorder %s12, 0
      %p88 = por %p86, %p87
      %p89 = scmp.ne.s32.totalorder %s81, %s83
      %p90 = scmp.eq.s32.totalorder %s17, 1
      %p91 = por %p89, %p90
      %p92 = scmp.ne.s32.totalorder %s83, %s84
      %p93 = scmp.eq.s32.totalorder %s17, 0
      %p94 = por %p92, %p93
      %p95 = scmp.ne.s32.totalorder %s83, %s84
      %p96 = scmp.eq.s32.totalorder %s18, 1
      %p97 = por %p95, %p96
      %p99 = scmp.ne.s32.totalorder %s84, %s98
      %p100 = scmp.eq.s32.totalorder %s18, 0
      %p101 = por %p99, %p100
      %s102 = ssub.s32 %s19, %s31
      %s103 = ssub.s32 %s20, %s27
      %s104 = sor.u32 %s102, %s103
      %p105 = scmp.eq.s32.totalorder %s104, 0
      %s107 = sadd.s32 %s106, 1
      %s108 = scalar_select %p105, %s106, %s107
      %p111 = pneg %p105
      %p112 = scmp.eq.s32.totalorder %s12, 1
      %p113 = por %p111, %p112
      %p114 = scmp.ne.s32.totalorder %s106, %s109
      %p115 = scmp.eq.s32.totalorder %s12, 0
      %p116 = por %p114, %p115
      %p117 = scmp.ne.s32.totalorder %s106, %s109
      %p118 = scmp.eq.s32.totalorder %s17, 1
      %p119 = por %p117, %p118
      %p120 = scmp.ne.s32.totalorder %s109, %s110
      %p121 = scmp.eq.s32.totalorder %s17, 0
      %p122 = por %p120, %p121
      %p123 = scmp.ne.s32.totalorder %s109, %s110
      %p124 = scmp.eq.s32.totalorder %s18, 1
      %p125 = por %p123, %p124
      %p127 = scmp.ne.s32.totalorder %s110, %s126
      %p128 = scmp.eq.s32.totalorder %s18, 0
      %p129 = por %p127, %p128
      %p130 = scmp.le.s32.totalorder 1, %s12
      %p131 = scmp.lt.s32.totalorder %s12, 3
      %p132 = pnand %p130, %p131
      %p133 = pneg %p132
      // Predicated region
      $region9: #{tpu_custom_call.1} parent=5 // pred_check
        _
      $region10: #{tpu_custom_call.1} parent=5 // pred_check_branch
        %135 = sbr.rel (%p132) target = $region12
      $region11: #{tpu_custom_call.1} parent=5 // pred_region
        %s136 = ssub.s32 %s12, 1
        // Predicated region
        $region13: #{tpu_custom_call.1} parent=11 // pred_check
          %p137 = pneg %p73
        $region14: #{tpu_custom_call.1} parent=11 // pred_check_branch
          %139 = sbr.rel (%p137) target = $region16
        $region15: #{tpu_custom_call.1} parent=11 // pred_region
          _
        $region16: #{tpu_custom_call.1} parent=11 // pred_fallthru
          _
        // Predicated region
        $region17: #{tpu_custom_call.1} parent=11 // pred_check
          %p140 = pneg %p94
        $region18: #{tpu_custom_call.1} parent=11 // pred_check_branch
          %142 = sbr.rel (%p140) target = $region20
        $region19: #{tpu_custom_call.1} parent=11 // pred_region
          _
        $region20: #{tpu_custom_call.1} parent=11 // pred_fallthru
          _
      $region12: #{tpu_custom_call.1} parent=5 // pred_fallthru
        _
      %p143 = scmp.lt.s32.totalorder %s12, 2
      // Predicated region
      $region21: #{tpu_custom_call.1} parent=5 // pred_check
        %p144 = pneg %p143
      $region22: #{tpu_custom_call.1} parent=5 // pred_check_branch
        %146 = sbr.rel (%p144) target = $region24
      $region23: #{tpu_custom_call.1} parent=5 // pred_region
        // Predicated region
        $region25: #{tpu_custom_call.1} parent=23 // pred_check
          %p147 = pneg %p46
        $region26: #{tpu_custom_call.1} parent=23 // pred_check_branch
          %149 = sbr.rel (%p147) target = $region28
        $region27: #{tpu_custom_call.1} parent=23 // pred_region
          %s150 = sand.u32 %s36, 1
          %s151 = scalar_lea.sflag [#allocation3], %s150
          %s152 = sand.u32 %s36, 1
          %s153 = smul.addr %s152, 32
          %s154 = scalar_lea.vmem [#allocation2], %s153
          %s155 = smul.u32 2, %s20
          %s157 = ssub.s32 512, 512
          %158 = vsyncadd %s151, %s157
          %s159 = smul.addr %s19, 4
          %s160 = sadd.s32 %s155, %s159
          %s161 = smul.addr %s160, 128
          %s162 = scalar_lea.hbm %s0, %s161
          %s163 = sshll.u32 %s154, 4
          %s164 = int_to_ptr.vmem [resolvable:$true] %s163
          %169 = dma.hbm_to_vmem [thread:$0]  %s162, 512, %s164, %s151, 256, 256, 16
        $region28: #{tpu_custom_call.1} parent=23 // pred_fallthru
          _
      $region24: #{tpu_custom_call.1} parent=5 // pred_fallthru
        _
      %p170 = scmp.le.s32.totalorder 1, %s12
      %p171 = scmp.lt.s32.totalorder %s12, 3
      %p172 = pnand %p170, %p171
      %p173 = pneg %p172
      // Predicated region
      $region29: #{tpu_custom_call.1} parent=5 // pred_check
        _
      $region30: #{tpu_custom_call.1} parent=5 // pred_check_branch
        %175 = sbr.rel (%p172) target = $region32
      $region31: #{tpu_custom_call.1} parent=5 // pred_region
        %s176 = ssub.s32 %s12, 1
        %s177 = sand.u32 %s39, 1
        %s178 = scalar_lea.sflag [#allocation3], %s177
        %s179 = sand.u32 %s39, 1
        %s180 = smul.addr %s179, 32
        %s181 = scalar_lea.vmem [#allocation2], %s180
        // Predicated region
        $region33: #{tpu_custom_call.1} parent=31 // pred_check
          %p182 = pneg %p52
        $region34: #{tpu_custom_call.1} parent=31 // pred_check_branch
          %184 = sbr.rel (%p182) target = $region36
        $region35: #{tpu_custom_call.1} parent=31 // pred_region
          %185 = dma.done %s178, 512
        $region36: #{tpu_custom_call.1} parent=31 // pred_fallthru
          _
        %s186 = sand.u32 %s39, 1
        %s187 = scalar_lea.sflag [#allocation3], %s186
        %s188 = sand.u32 %s39, 1
        %s189 = smul.addr %s188, 32
        %s190 = scalar_lea.vmem [#allocation2], %s189
        %p191 = pneg %p52
        %p192 = pneg %p49
        %p193 = pneg %p73
        %p194 = pneg %p70
        %p195 = pneg %p94
        %p196 = pneg %p91
        %p197 = pneg %p122
        %p198 = pneg %p119
        %s199 = smul.u32 2, %s22
        %p200 = scmp.lt.s32.totalorder %s21, 1
        %s201 = scalar_select %p200, %s21, 1
        %p202 = scmp.lt.s32.totalorder %s199, 1
        %s203 = scalar_select %p202, %s199, 1
        %s204 = smul.addr %s201, 2
        %s205 = sadd.s32 %s203, %s204
        %s206 = smul.addr %s205, 8
        %s207 = scalar_lea.vmem %s3, %s206
        %s208 = smul.u32 2, %s22
        %s209 = smul.u32 2, %s22
        %p210 = scmp.lt.s32.totalorder %s21, 1
        %s211 = scalar_select %p210, %s21, 1
        %p212 = scmp.lt.s32.totalorder %s209, 1
        %s213 = scalar_select %p212, %s209, 1
        %s214 = smul.addr %s211, 2
        %s215 = sadd.s32 %s213, %s214
        %s216 = smul.addr %s215, 8
        %s217 = scalar_lea.vmem %s3, %s216
        %s218 = smul.u32 2, %s22
        %v220 = vld [vmem:[%s181] sm:$0xff]
        %v221 = vld [vmem:[%s181 + $0x8] sm:$0xff]
        %v222 = vld [vmem:[%s181 + $0x10] sm:$0xff]
        %v223 = vld [vmem:[%s181 + $0x18] sm:$0xff]
        %v224 = vpack.c.bf16 %v222, %v220
        %v225 = vpack.c.bf16 %v223, %v221
        %v226 = vld [vmem:[%s1] sm:$0xf]
        %v227 = vld [vmem:[%s1 + $0x4] sm:$0xf]
        %v228 = vld [vmem:[%s2] sm:$0xff]
        %v229 = vld [vmem:[%s2 + $0x8] sm:$0xff]
        %231 = vset.pattern.permute.xlu0 0
        %232 = vperm.xlu0 %231, %v228
        %v233 = vpop.permute.xlu0 %232
        %236 = vset.pattern.permute.xlu0 0
        %237 = vperm.xlu0 %236, %v229
        %v238 = vpop.permute.xlu0 %237
        %v242 = vunpack.c.l.b16 %v226
        %v243 = vunpack.c.l.b16 %v227
        %v244 = vpack.c.b16 %v243, %v242
        %vm245 = vcmask 130048
        %v247 = vsel %vm245, %v244, 0
        %249 = vmatprep.subr.bf16.mxu0 0
        %250 = vmatpush1.bf16.msra.mxu0 0
        %251 = vmatprep.subr.bf16.mxu0 0
        %252 = vmatpush1.bf16.msra.mxu0 0
        %253 = vmatprep.subr.bf16.mxu0 0
        %254 = vmatpush1.bf16.msra.mxu0 0
        %255 = vmatprep.subr.bf16.mxu0 0
        %256 = vmatpush1.bf16.msra.mxu0 0
        %257 = vmatprep.subr.bf16.mxu0 0
        %258 = vmatpush1.bf16.msra.mxu0 0
        %259 = vmatprep.subr.bf16.mxu0 0
        %260 = vmatpush1.bf16.msra.mxu0 0
        %261 = vmatprep.subr.bf16.mxu0 0
        %262 = vmatpush1.bf16.msra.mxu0 0
        %263 = vmatprep.subr.bf16.mxu0 %v225
        %264 = vmatpush1.bf16.msra.mxu0 %v224
        %265 = vmatprep.subr.bf16.mxu0 0
        %266 = vmatpush2.bf16.msra.mxu0 0
        %267 = vmatprep.subr.bf16.mxu0 0
        %268 = vmatpush2.bf16.msra.mxu0 0
        %269 = vmatprep.subr.bf16.mxu0 0
        %270 = vmatpush2.bf16.msra.mxu0 0
        %271 = vmatprep.subr.bf16.mxu0 0
        %272 = vmatpush2.bf16.msra.mxu0 0
        %273 = vmatprep.subr.bf16.mxu0 0
        %274 = vmatpush2.bf16.msra.mxu0 0
        %275 = vmatprep.subr.bf16.mxu0 0
        %276 = vmatpush2.bf16.msra.mxu0 0
        %277 = vmatprep.subr.bf16.mxu0 0
        %278 = vmatpush2.bf16.msra.mxu0 0
        %279 = vmatprep.subr.bf16.mxu0 0
        %280 = vmatpush2.bf16.msra.mxu0 0
        %281 = vmatprep.mubr.bf16.mxu0 0
        %282 = vmatmul.mubr.bf16.gmra.mxu0 %v247
        %v283 = vpop.f32.mrf.mxu0
        %v284 = vadd.f32 %v233, %v283
        %v285 = vpop.f32.mrf.mxu0
        %v286 = vadd.f32 %v233, %v285
        %v287 = vpop.f32.mrf.mxu0
        %v288 = vadd.f32 %v238, %v287
        %v289 = vpop.f32.mrf.mxu0
        %v290 = vadd.f32 %v238, %v289
        %291 = vdwg.mxu0
        %v292 = vtanh.pop %v284
        %v293 = vtanh.pop %v286
        %v294 = vmul.f32 %v292, %v288
        %v295 = vmul.f32 %v293, %v290
        %296 = vst [vmem:[%s217] sm:$0x3f] %v294
        %297 = vst [vmem:[%s217 + $0x8] sm:$0x3f] %v295
        %s298 = smul.u32 2, %s22
        %p299 = scmp.lt.s32.totalorder %s21, 1
        %s300 = scalar_select %p299, %s21, 1
        %p301 = scmp.lt.s32.totalorder %s298, 1
        %s302 = scalar_select %p301, %s298, 1
        %s303 = smul.addr %s300, 2
        %s304 = sadd.s32 %s302, %s303
        %s305 = smul.addr %s304, 8
        %s306 = scalar_lea.vmem %s3, %s305
        // Predicated region
        $region37: #{tpu_custom_call.1} parent=31 // pred_check
          %p307 = pneg %p119
        $region38: #{tpu_custom_call.1} parent=31 // pred_check_branch
          %309 = sbr.rel (%p307) target = $region40
        $region39: #{tpu_custom_call.1} parent=31 // pred_region
          %s310 = smul.u32 2, %s22
        $region40: #{tpu_custom_call.1} parent=31 // pred_fallthru
          _
      $region32: #{tpu_custom_call.1} parent=5 // pred_fallthru
        _
      %p311 = scmp.le.s32.totalorder 2, %s12
      // Predicated region
      $region41: #{tpu_custom_call.1} parent=5 // pred_check
        %p312 = pneg %p311
      $region42: #{tpu_custom_call.1} parent=5 // pred_check_branch
        %314 = sbr.rel (%p312) target = $region44
      $region43: #{tpu_custom_call.1} parent=5 // pred_region
        %s315 = ssub.s32 %s12, 2
        // Predicated region
        $region45: #{tpu_custom_call.1} parent=43 // pred_check
          %p316 = pneg %p125
        $region46: #{tpu_custom_call.1} parent=43 // pred_check_branch
          %318 = sbr.rel (%p316) target = $region48
        $region47: #{tpu_custom_call.1} parent=43 // pred_region
          %s319 = smul.u32 2, %s24
          %p320 = scmp.lt.s32.totalorder %s23, 1
          %s321 = scalar_select %p320, %s23, 1
          %p322 = scmp.lt.s32.totalorder %s319, 1
          %s323 = scalar_select %p322, %s319, 1
          %s324 = smul.addr %s321, 2
          %s325 = sadd.s32 %s323, %s324
          %s326 = smul.addr %s325, 8
          %s327 = scalar_lea.vmem %s3, %s326
        $region48: #{tpu_custom_call.1} parent=43 // pred_fallthru
          _
      $region44: #{tpu_custom_call.1} parent=5 // pred_fallthru
        _
    $region6: #{tpu_custom_call.1} parent=1 // loop_footer
      %s16 = sadd.s32 1, %s12
    $region7: #{tpu_custom_call.1} parent=1 // loop_footer_branch
      %11 = sbr.rel target = $region3
    $region8: #{tpu_custom_call.1} parent=1 // loop_exit
      _
    %328 = vsyncpa [#allocation3], 1
    %s329 = scalar_lea.sflag [#allocation3], 1
    %330 = vsyncpa %s329, 1

</llo_original>
